<compile_context>
chip_gen: v6e
topology: v6e:2x2x1
jax: 0.10.0
libtpu: 0.0.40
codegen_flags: <defaults>
</compile_context>

<pallas_src>
import functools

import jax
import jax.numpy as jnp
from jax.experimental import pallas as pl
from jax.experimental.pallas import tpu as pltpu

BN_EPS = 1e-5


def _round_up(n, m):
    return ((n + m - 1) // m) * m


def _fused_kernel(x_ref, w1_ref, b1_ref, gamma_ref, beta_ref, w2_ref, b2_ref,
                  o_ref, *, true_batch):
    """Single-tile path: whole batch resident in VMEM, one pass."""
    x = x_ref[...]
    h = jnp.dot(x, w1_ref[...], preferred_element_type=jnp.float32)
    h = jnp.maximum(h + b1_ref[...], 0.0)

    inv_b = 1.0 / true_batch
    mean = jnp.sum(h, axis=0, keepdims=True) * inv_b
    var = jnp.maximum(jnp.sum(h * h, axis=0, keepdims=True) * inv_b
                      - mean * mean, 0.0)
    scale = gamma_ref[...] * jax.lax.rsqrt(var + BN_EPS)    # [1, H]
    shift = beta_ref[...] - mean * scale                    # [1, H]

    # Fold the additive BN term into the l2 bias: b2' = b2 + shift @ W2.
    bias = b2_ref[...] + jnp.dot(shift.astype(w2_ref.dtype), w2_ref[...],
                                 preferred_element_type=jnp.float32)
    hs = (h * scale).astype(w2_ref.dtype)
    out = jnp.dot(hs, w2_ref[...], preferred_element_type=jnp.float32)
    o_ref[...] = (out + bias).astype(o_ref.dtype)


def _two_phase_kernel(x_ref, w1_ref, b1_ref, gamma_ref, beta_ref,
                      w2_ref, b2_ref, o_ref,
                      sum_ref, sumsq_ref, scale_ref, bias_ref,
                      *, true_batch, tile_rows, mask_rows):
    """Tiled path: phase 0 = batch statistics, phase 1 = output."""
    p = pl.program_id(0)   # 0 = stats pass, 1 = output pass
    t = pl.program_id(1)   # batch-tile index

    # h = relu(x @ W1 + b1); recomputed in both passes (x is 10x narrower than
    # h, so recompute beats staging h through HBM).
    x = x_ref[...]
    h = jnp.dot(x, w1_ref[...], preferred_element_type=jnp.float32)
    h = jnp.maximum(h + b1_ref[...], 0.0)

    @pl.when((p == 0) & (t == 0))
    def _init_stats():
        sum_ref[...] = jnp.zeros_like(sum_ref)
        sumsq_ref[...] = jnp.zeros_like(sumsq_ref)

    @pl.when(p == 0)
    def _accumulate_stats():
        if mask_rows:
            row = (jax.lax.broadcasted_iota(jnp.int32, (tile_rows, 1), 0)
                   + t * tile_rows)
            hm = jnp.where(row < true_batch, h, 0.0)
        else:
            hm = h
        sum_ref[...] += jnp.sum(hm, axis=0, keepdims=True)
        sumsq_ref[...] += jnp.sum(hm * hm, axis=0, keepdims=True)

    @pl.when((p == 1) & (t == 0))
    def _finalize_stats():
        inv_b = 1.0 / true_batch
        mean = sum_ref[...] * inv_b
        var = jnp.maximum(sumsq_ref[...] * inv_b - mean * mean, 0.0)
        scale = gamma_ref[...] * jax.lax.rsqrt(var + BN_EPS)   # [1, H]
        shift = beta_ref[...] - mean * scale                   # [1, H]
        scale_ref[...] = scale
        # Fold the additive BN term into the l2 bias: b2' = b2 + shift @ W2.
        bias_ref[...] = b2_ref[...] + jnp.dot(
            shift.astype(w2_ref.dtype), w2_ref[...],
            preferred_element_type=jnp.float32)

    @pl.when(p == 1)
    def _emit_output():
        hs = (h * scale_ref[...]).astype(w2_ref.dtype)
        out = jnp.dot(hs, w2_ref[...], preferred_element_type=jnp.float32)
        o_ref[...] = (out + bias_ref[...]).astype(o_ref.dtype)


def wide_predictor(x, w1, b1, gamma, beta, w2, b2, *,
                   batch_tile=512, use_bf16=False):
    """Forward pass of WidePredictor. Weights are [in, out] (pre-transposed)."""
    out_dtype = x.dtype
    B, in_dim = x.shape
    in_dim_w, hidden = w1.shape
    hidden_w2, out_dim = w2.shape
    assert in_dim_w == in_dim and hidden_w2 == hidden

    hidden_p = _round_up(hidden, 128)
    out_p = _round_up(out_dim, 128)

    # Zero-pad to lane-dense shapes. Padded hidden features contribute nothing
    # (padded W2 rows / gamma are zero); padded output columns are sliced off.
    if hidden_p != hidden:
        hp = hidden_p - hidden
        w1 = jnp.pad(w1, ((0, 0), (0, hp)))
        b1 = jnp.pad(b1, ((0, 0), (0, hp)))
        gamma = jnp.pad(gamma, ((0, 0), (0, hp)))
        beta = jnp.pad(beta, ((0, 0), (0, hp)))
        w2 = jnp.pad(w2, ((0, hp), (0, 0)))
    if out_p != out_dim:
        op = out_p - out_dim
        w2 = jnp.pad(w2, ((0, 0), (0, op)))
        b2 = jnp.pad(b2, ((0, 0), (0, op)))

    if use_bf16:
        # bf16 MXU inputs (f32 accumulation kept inside the kernel).
        x = x.astype(jnp.bfloat16)
        w1 = w1.astype(jnp.bfloat16)
        w2 = w2.astype(jnp.bfloat16)

    if B <= batch_tile:
        # --- Fused single-pass path: everything resident, no duplicate work.
        kernel = functools.partial(_fused_kernel, true_batch=B)
        out = pl.pallas_call(
            kernel,
            out_shape=jax.ShapeDtypeStruct((B, out_p), jnp.float32),
            grid=(1,),
            in_specs=[
                pl.BlockSpec((B, in_dim), lambda i: (0, 0)),         # x
                pl.BlockSpec((in_dim, hidden_p), lambda i: (0, 0)),  # W1
                pl.BlockSpec((1, hidden_p), lambda i: (0, 0)),       # b1
                pl.BlockSpec((1, hidden_p), lambda i: (0, 0)),       # gamma
                pl.BlockSpec((1, hidden_p), lambda i: (0, 0)),       # beta
                pl.BlockSpec((hidden_p, out_p), lambda i: (0, 0)),   # W2
                pl.BlockSpec((1, out_p), lambda i: (0, 0)),          # b2
            ],
            out_specs=pl.BlockSpec((B, out_p), lambda i: (0, 0)),
            compiler_params=pltpu.CompilerParams(
                dimension_semantics=("arbitrary",)),
        )(x, w1, b1, gamma, beta, w2, b2)
        return out[:, :out_dim].astype(out_dtype)

    # --- Tiled two-phase path for large batches.
    tb = batch_tile
    b_pad = _round_up(B, tb)
    nt = b_pad // tb
    if b_pad != B:
        x = jnp.pad(x, ((0, b_pad - B), (0, 0)))

    kernel = functools.partial(_two_phase_kernel,
                               true_batch=B, tile_rows=tb,
                               mask_rows=(b_pad != B))

    out = pl.pallas_call(
        kernel,
        out_shape=jax.ShapeDtypeStruct((b_pad, out_p), jnp.float32),
        grid=(2, nt),
        in_specs=[
            pl.BlockSpec((tb, in_dim), lambda p, t: (t, 0)),        # x tile
            pl.BlockSpec((in_dim, hidden_p), lambda p, t: (0, 0)),  # W1 (resident)
            pl.BlockSpec((1, hidden_p), lambda p, t: (0, 0)),       # b1
            pl.BlockSpec((1, hidden_p), lambda p, t: (0, 0)),       # gamma
            pl.BlockSpec((1, hidden_p), lambda p, t: (0, 0)),       # beta
            pl.BlockSpec((hidden_p, out_p), lambda p, t: (0, 0)),   # W2 (resident)
            pl.BlockSpec((1, out_p), lambda p, t: (0, 0)),          # b2
        ],
        # Phase 0 never writes the output; pinning its block index at 0 means
        # no spurious garbage writebacks happen until phase 1 produces data.
        out_specs=pl.BlockSpec((tb, out_p), lambda p, t: (p * t, 0)),
        scratch_shapes=[
            pltpu.VMEM((1, hidden_p), jnp.float32),   # sum(h)
            pltpu.VMEM((1, hidden_p), jnp.float32),   # sum(h*h)
            pltpu.VMEM((1, hidden_p), jnp.float32),   # BN scale = gamma*rsqrt(var+eps)
            pltpu.VMEM((1, out_p), jnp.float32),      # folded l2 bias
        ],
        compiler_params=pltpu.CompilerParams(
            # Both axes sequential: phase 0 feeds phase 1 through VMEM scratch,
            # so megacore sharding of the batch axis would split the BN stats.
            dimension_semantics=("arbitrary", "arbitrary")),
    )(x, w1, b1, gamma, beta, w2, b2)

    return out[:B, :out_dim].astype(out_dtype)


def reference(x, w1, b1, gamma, beta, w2, b2):
    h = jnp.maximum(x @ w1 + b1, 0.0)
    mean = jnp.mean(h, axis=0, keepdims=True)
    var = jnp.mean((h - mean) ** 2, axis=0, keepdims=True)
    h = (h - mean) * jax.lax.rsqrt(var + BN_EPS) * gamma + beta
    return h @ w2 + b2


if __name__ == "__main__":
    feature_dim = 32                 # -> in = 64, hidden = 640, out = 32
    in_dim = feature_dim * 2
    hidden = feature_dim * 2 * 10
    out_dim = feature_dim

    key = jax.random.PRNGKey(0)
    k_x, k_w1, k_b1, k_w2, k_b2, k_x2 = jax.random.split(key, 6)

    # Deterministic parameter init (roughly matching nn.Linear's scale),
    # weights stored transposed as [in, out].
    w1 = jax.random.uniform(k_w1, (in_dim, hidden), jnp.float32,
                            -1.0 / jnp.sqrt(in_dim), 1.0 / jnp.sqrt(in_dim))
    b1 = jax.random.uniform(k_b1, (1, hidden), jnp.float32,
                            -1.0 / jnp.sqrt(in_dim), 1.0 / jnp.sqrt(in_dim))
    gamma = jnp.ones((1, hidden), jnp.float32)   # BatchNorm1d default weight
    beta = jnp.zeros((1, hidden), jnp.float32)   # BatchNorm1d default bias
    w2 = jax.random.uniform(k_w2, (hidden, out_dim), jnp.float32,
                            -1.0 / jnp.sqrt(hidden), 1.0 / jnp.sqrt(hidden))
    b2 = jax.random.uniform(k_b2, (1, out_dim), jnp.float32,
                            -1.0 / jnp.sqrt(hidden), 1.0 / jnp.sqrt(hidden))

    # 1) Small batch -> fused single-pass path.
    x = jax.random.normal(k_x, (8, in_dim), dtype=jnp.float32)
    out = jax.block_until_ready(wide_predictor(x, w1, b1, gamma, beta, w2, b2))
    ref = reference(x, w1, b1, gamma, beta, w2, b2)
    assert out.shape == (8, out_dim)
    assert jnp.allclose(out, ref, atol=1e-4, rtol=1e-4), "fused path mismatch"

    # 2) Larger batch with a small forced tile -> two-phase tiled path
    #    (exercises multi-tile stats accumulation + padded-row masking).
    x2 = jax.random.normal(k_x2, (40, in_dim), dtype=jnp.float32)
    out2 = jax.block_until_ready(
        wide_predictor(x2, w1, b1, gamma, beta, w2, b2, batch_tile=16))
    ref2 = reference(x2, w1, b1, gamma, beta, w2, b2)
    assert out2.shape == (40, out_dim)
    assert jnp.allclose(out2, ref2, atol=1e-4, rtol=1e-4), "tiled path mismatch"

    print("KERNEL_OK")
</pallas_src>

<mosaic_0001>
module attributes {stable_mosaic.version = 11 : i64} {
  func.func @_fused_kernel(%arg0: i32, %arg1: memref<8x64xf32, #tpu.memory_space<vmem>>, %arg2: memref<64x640xf32, #tpu.memory_space<vmem>>, %arg3: memref<1x640xf32, #tpu.memory_space<vmem>>, %arg4: memref<1x640xf32, #tpu.memory_space<vmem>>, %arg5: memref<1x640xf32, #tpu.memory_space<vmem>>, %arg6: memref<640x128xf32, #tpu.memory_space<vmem>>, %arg7: memref<1x128xf32, #tpu.memory_space<vmem>>, %arg8: memref<8x128xf32, #tpu.memory_space<vmem>>) attributes {dimension_semantics = [#tpu.dimension_semantics<arbitrary>], iteration_bounds = array<i64: 1>, scalar_prefetch = 0 : i64, scratch_operands = 0 : i64, tpu.core_type = #tpu.core_type<tc>, window_params = [{pipeline_mode = #tpu.pipeline_mode<synchronous>, transform_indices = @transform_0, window_bounds = array<i64: 8, 64>}, {pipeline_mode = #tpu.pipeline_mode<synchronous>, transform_indices = @transform_1, window_bounds = array<i64: 64, 640>}, {pipeline_mode = #tpu.pipeline_mode<synchronous>, transform_indices = @transform_2, window_bounds = array<i64: 1, 640>}, {pipeline_mode = #tpu.pipeline_mode<synchronous>, transform_indices = @transform_3, window_bounds = array<i64: 1, 640>}, {pipeline_mode = #tpu.pipeline_mode<synchronous>, transform_indices = @transform_4, window_bounds = array<i64: 1, 640>}, {pipeline_mode = #tpu.pipeline_mode<synchronous>, transform_indices = @transform_5, window_bounds = array<i64: 640, 128>}, {pipeline_mode = #tpu.pipeline_mode<synchronous>, transform_indices = @transform_6, window_bounds = array<i64: 1, 128>}, {pipeline_mode = #tpu.pipeline_mode<synchronous>, transform_indices = @transform_7, window_bounds = array<i64: 8, 128>}]} {
    %c0 = arith.constant 0 : index
    %c0_0 = arith.constant 0 : index
    %0 = vector.load %arg1[%c0, %c0_0] : memref<8x64xf32, #tpu.memory_space<vmem>>, vector<8x64xf32>
    %c0_1 = arith.constant 0 : index
    %c0_2 = arith.constant 0 : index
    %1 = vector.load %arg2[%c0_1, %c0_2] : memref<64x640xf32, #tpu.memory_space<vmem>>, vector<64x640xf32>
    %cst = arith.constant dense<0.000000e+00> : vector<8x640xf32>
    %2 = tpu.matmul %0, %1, %cst {dimension_numbers = #tpu.dot_dimension_numbers<[1], [0], [0], [1], [0, 0, 1, 1], [], []>} : vector<8x64xf32>, vector<64x640xf32>, vector<8x640xf32> -> vector<8x640xf32>
    %c0_3 = arith.constant 0 : index
    %c0_4 = arith.constant 0 : index
    %3 = vector.load %arg3[%c0_3, %c0_4] : memref<1x640xf32, #tpu.memory_space<vmem>>, vector<1x640xf32>
    %4 = vector.broadcast %3 : vector<1x640xf32> to vector<8x640xf32>
    %5 = arith.addf %2, %4 : vector<8x640xf32>
    %cst_5 = arith.constant 0.000000e+00 : f32
    %6 = vector.broadcast %cst_5 : f32 to vector<8x640xf32>
    %7 = arith.maximumf %5, %6 : vector<8x640xf32>
    %cst_6 = arith.constant dense<0.000000e+00> : vector<640xf32>
    %8 = vector.multi_reduction <add>, %7, %cst_6 [0] : vector<8x640xf32> to vector<640xf32>
    %9 = vector.shape_cast %8 : vector<640xf32> to vector<1x640xf32>
    %cst_7 = arith.constant 1.250000e-01 : f32
    %10 = vector.broadcast %cst_7 : f32 to vector<1x640xf32>
    %11 = arith.mulf %9, %10 : vector<1x640xf32>
    %12 = arith.mulf %7, %7 : vector<8x640xf32>
    %cst_8 = arith.constant dense<0.000000e+00> : vector<640xf32>
    %13 = vector.multi_reduction <add>, %12, %cst_8 [0] : vector<8x640xf32> to vector<640xf32>
    %14 = vector.shape_cast %13 : vector<640xf32> to vector<1x640xf32>
    %cst_9 = arith.constant 1.250000e-01 : f32
    %15 = vector.broadcast %cst_9 : f32 to vector<1x640xf32>
    %16 = arith.mulf %14, %15 : vector<1x640xf32>
    %17 = arith.mulf %11, %11 : vector<1x640xf32>
    %18 = arith.subf %16, %17 : vector<1x640xf32>
    %cst_10 = arith.constant 0.000000e+00 : f32
    %19 = vector.broadcast %cst_10 : f32 to vector<1x640xf32>
    %20 = arith.maximumf %18, %19 : vector<1x640xf32>
    %c0_11 = arith.constant 0 : index
    %c0_12 = arith.constant 0 : index
    %21 = vector.load %arg4[%c0_11, %c0_12] : memref<1x640xf32, #tpu.memory_space<vmem>>, vector<1x640xf32>
    %cst_13 = arith.constant 9.99999974E-6 : f32
    %22 = vector.broadcast %cst_13 : f32 to vector<1x640xf32>
    %23 = arith.addf %20, %22 : vector<1x640xf32>
    %24 = math.rsqrt %23 : vector<1x640xf32>
    %25 = arith.mulf %21, %24 : vector<1x640xf32>
    %c0_14 = arith.constant 0 : index
    %c0_15 = arith.constant 0 : index
    %26 = vector.load %arg5[%c0_14, %c0_15] : memref<1x640xf32, #tpu.memory_space<vmem>>, vector<1x640xf32>
    %27 = arith.mulf %11, %25 : vector<1x640xf32>
    %28 = arith.subf %26, %27 : vector<1x640xf32>
    %c0_16 = arith.constant 0 : index
    %c0_17 = arith.constant 0 : index
    %29 = vector.load %arg7[%c0_16, %c0_17] : memref<1x128xf32, #tpu.memory_space<vmem>>, vector<1x128xf32>
    %c0_18 = arith.constant 0 : index
    %c0_19 = arith.constant 0 : index
    %30 = vector.load %arg6[%c0_18, %c0_19] : memref<640x128xf32, #tpu.memory_space<vmem>>, vector<640x128xf32>
    %cst_20 = arith.constant dense<0.000000e+00> : vector<1x128xf32>
    %31 = tpu.matmul %28, %30, %cst_20 {dimension_numbers = #tpu.dot_dimension_numbers<[1], [0], [0], [1], [0, 0, 1, 1], [], []>} : vector<1x640xf32>, vector<640x128xf32>, vector<1x128xf32> -> vector<1x128xf32>
    %32 = arith.addf %29, %31 : vector<1x128xf32>
    %33 = vector.broadcast %25 : vector<1x640xf32> to vector<8x640xf32>
    %34 = arith.mulf %7, %33 : vector<8x640xf32>
    %c0_21 = arith.constant 0 : index
    %c0_22 = arith.constant 0 : index
    %35 = vector.load %arg6[%c0_21, %c0_22] : memref<640x128xf32, #tpu.memory_space<vmem>>, vector<640x128xf32>
    %cst_23 = arith.constant dense<0.000000e+00> : vector<8x128xf32>
    %36 = tpu.matmul %34, %35, %cst_23 {dimension_numbers = #tpu.dot_dimension_numbers<[1], [0], [0], [1], [0, 0, 1, 1], [], []>} : vector<8x640xf32>, vector<640x128xf32>, vector<8x128xf32> -> vector<8x128xf32>
    %37 = vector.broadcast %32 : vector<1x128xf32> to vector<8x128xf32>
    %38 = arith.addf %36, %37 : vector<8x128xf32>
    %c0_24 = arith.constant 0 : index
    %c0_25 = arith.constant 0 : index
    %39 = vector.load %arg8[%c0_24, %c0_25] : memref<8x128xf32, #tpu.memory_space<vmem>>, vector<8x128xf32>
    tpu.vector_store %arg8[%c0_24, %c0_25], %38 {strides = array<i32>} : memref<8x128xf32, #tpu.memory_space<vmem>>, vector<8x128xf32>,
    return
  }
  func.func @transform_0(%arg0: i32) -> (i32, i32) {
    %c0_i32 = arith.constant 0 : i32
    %c0_i32_0 = arith.constant 0 : i32
    %c0_i32_1 = arith.constant 0 : i32
    return %c0_i32, %c0_i32_0 : i32, i32
  }
  func.func @transform_1(%arg0: i32) -> (i32, i32) {
    %c0_i32 = arith.constant 0 : i32
    %c0_i32_0 = arith.constant 0 : i32
    %c0_i32_1 = arith.constant 0 : i32
    return %c0_i32, %c0_i32_0 : i32, i32
  }
  func.func @transform_2(%arg0: i32) -> (i32, i32) {
    %c0_i32 = arith.constant 0 : i32
    %c0_i32_0 = arith.constant 0 : i32
    %c0_i32_1 = arith.constant 0 : i32
    return %c0_i32, %c0_i32_0 : i32, i32
  }
  func.func @transform_3(%arg0: i32) -> (i32, i32) {
    %c0_i32 = arith.constant 0 : i32
    %c0_i32_0 = arith.constant 0 : i32
    %c0_i32_1 = arith.constant 0 : i32
    return %c0_i32, %c0_i32_0 : i32, i32
  }
  func.func @transform_4(%arg0: i32) -> (i32, i32) {
    %c0_i32 = arith.constant 0 : i32
    %c0_i32_0 = arith.constant 0 : i32
    %c0_i32_1 = arith.constant 0 : i32
    return %c0_i32, %c0_i32_0 : i32, i32
  }
  func.func @transform_5(%arg0: i32) -> (i32, i32) {
    %c0_i32 = arith.constant 0 : i32
    %c0_i32_0 = arith.constant 0 : i32
    %c0_i32_1 = arith.constant 0 : i32
    return %c0_i32, %c0_i32_0 : i32, i32
  }
  func.func @transform_6(%arg0: i32) -> (i32, i32) {
    %c0_i32 = arith.constant 0 : i32
    %c0_i32_0 = arith.constant 0 : i32
    %c0_i32_1 = arith.constant 0 : i32
    return %c0_i32, %c0_i32_0 : i32, i32
  }
  func.func @transform_7(%arg0: i32) -> (i32, i32) {
    %c0_i32 = arith.constant 0 : i32
    %c0_i32_0 = arith.constant 0 : i32
    %c0_i32_1 = arith.constant 0 : i32
    return %c0_i32, %c0_i32_0 : i32, i32
  }
}

</mosaic_0001>

<llo_original>
// kernel: tpu_custom_call.1
$region0: #{tpu_custom_call.1}
  #allocation0 [shape = 'u32[]', space=smem, size = 0x4, offset = 0x4, fixed_abs, tag = 'smem constant byte address 0x4 - core index']
  #allocation1 [shape = 'u32[144,128]{1,0:T(1,128)}', space=vmem, size = 0x12000, scoped, tag = 'internal scratch']
  %s0 = inlined_call_operand.hbm [shape: f32[8,64], index: 0, kind: input, shape index: {}]
  %s1 = inlined_call_operand.hbm [shape: f32[64,640], index: 1, kind: input, shape index: {}]
  %s2 = inlined_call_operand.hbm [shape: f32[1,640], index: 2, kind: input, shape index: {}]
  %s3 = inlined_call_operand.vmem [shape: f32[1,640], index: 3, kind: input, shape index: {}]
  %s4 = inlined_call_operand.hbm [shape: f32[1,640], index: 4, kind: input, shape index: {}]
  %s5 = inlined_call_operand.hbm [shape: f32[640,128], index: 5, kind: input, shape index: {}]
  %s6 = inlined_call_operand.vmem [shape: f32[1,128], index: 6, kind: input, shape index: {}]
  %s7 = inlined_call_operand.hbm [shape: f32[8,128], index: 7, kind: output, shape index: {}]
  %s8 = sld [smem:[#allocation0]]
  $region58: #{tpu_custom_call.1} parent=0
    _
  %s10 = ssub.s32 1, %s8
  %s11 = scalar_select 0, %s10, %s8
  $region1: #{tpu_custom_call.1} parent=0
    #allocation2 [shape = 'u8[4096]{0}', space=vmem, size = 0x1000, scoped, tag = 'input window, operand 0, single buffered']
    #allocation3 [shape = 's32[1]{0}', space=sflag, size = 0x4, scoped, tag = 'scoped memory for tpu_custom_call.1']
    #allocation4 [shape = 's32[1]{0}', space=sflag, size = 0x4, scoped, tag = 'scoped memory for tpu_custom_call.1']
    #allocation5 [shape = 'u8[163840]{0}', space=vmem, size = 0x28000, scoped, tag = 'input window, operand 1, single buffered']
    #allocation6 [shape = 's32[1]{0}', space=sflag, size = 0x4, scoped, tag = 'scoped memory for tpu_custom_call.1']
    #allocation7 [shape = 'u8[2560]{0}', space=vmem, size = 0xc00, scoped, tag = 'input window, operand 2, single buffered']
    #allocation8 [shape = 'u8[2560]{0}', space=vmem, size = 0xc00, scoped, tag = 'input window, operand 4, single buffered']
    #allocation9 [shape = 's32[1]{0}', space=sflag, size = 0x4, scoped, tag = 'scoped memory for tpu_custom_call.1']
    #allocation10 [shape = 'u8[327680]{0}', space=vmem, size = 0x50000, scoped, tag = 'input window, operand 5, single buffered']
    #allocation11 [shape = 'u8[4096]{0}', space=vmem, size = 0x1000, scoped, tag = 'output window, operand 0, single buffered']
    %12 = vsyncpa [#allocation3], 0
    %13 = vsyncpa [#allocation6], 0
    %14 = vsyncpa [#allocation9], 0
    %15 = vsyncpa [#allocation4], 0
    // Predicated region
    $region2: #{tpu_custom_call.1} parent=1 // pred_check
      _
    $region3: #{tpu_custom_call.1} parent=1 // pred_check_branch
      %17 = sbr.rel (0) target = $region5
    $region4: #{tpu_custom_call.1} parent=1 // pred_region
      %s19 = ssub.s32 128, 128
      %20 = vsyncadd [#allocation3], %s19
      %s22 = sshll.u32 [#allocation2], 4
      %s23 = int_to_ptr.vmem [resolvable:$true] %s22
      %25 = dma.hbm_to_vmem [thread:$0]  %s0, 128, %s23, [#allocation3]
    $region5: #{tpu_custom_call.1} parent=1 // pred_fallthru
      _
    // Predicated region
    $region6: #{tpu_custom_call.1} parent=1 // pred_check
      _
    $region7: #{tpu_custom_call.1} parent=1 // pred_check_branch
      %27 = sbr.rel (0) target = $region9
    $region8: #{tpu_custom_call.1} parent=1 // pred_region
      %s29 = ssub.s32 5120, 5120
      %30 = vsyncadd [#allocation6], %s29
      %s31 = sshll.u32 [#allocation5], 4
      %s32 = int_to_ptr.vmem [resolvable:$true] %s31
      %37 = dma.hbm_to_vmem [thread:$0]  %s1, 5120, %s32, [#allocation6], 640, 640, 40
    $region9: #{tpu_custom_call.1} parent=1 // pred_fallthru
      _
    // Predicated region
    $region10: #{tpu_custom_call.1} parent=1 // pred_check
      _
    $region11: #{tpu_custom_call.1} parent=1 // pred_check_branch
      %39 = sbr.rel (0) target = $region13
    $region12: #{tpu_custom_call.1} parent=1 // pred_region
      %s41 = ssub.s32 80, 80
      %42 = vsyncadd [#allocation6], %s41
      %s44 = sshll.u32 [#allocation7], 4
      %s45 = int_to_ptr.vmem [resolvable:$true] %s44
      %47 = dma.hbm_to_vmem [thread:$0]  %s2, 80, %s45, [#allocation6]
    $region13: #{tpu_custom_call.1} parent=1 // pred_fallthru
      _
    // Predicated region
    $region14: #{tpu_custom_call.1} parent=1 // pred_check
      _
    $region15: #{tpu_custom_call.1} parent=1 // pred_check_branch
      %49 = sbr.rel (0) target = $region17
    $region16: #{tpu_custom_call.1} parent=1 // pred_region
      _
    $region17: #{tpu_custom_call.1} parent=1 // pred_fallthru
      _
    // Predicated region
    $region18: #{tpu_custom_call.1} parent=1 // pred_check
      _
    $region19: #{tpu_custom_call.1} parent=1 // pred_check_branch
      %51 = sbr.rel (0) target = $region21
    $region20: #{tpu_custom_call.1} parent=1 // pred_region
      %s53 = ssub.s32 80, 80
      %54 = vsyncadd [#allocation9], %s53
      %s56 = sshll.u32 [#allocation8], 4
      %s57 = int_to_ptr.vmem [resolvable:$true] %s56
      %59 = dma.hbm_to_vmem [thread:$0]  %s4, 80, %s57, [#allocation9]
    $region21: #{tpu_custom_call.1} parent=1 // pred_fallthru
      _
    // Predicated region
    $region22: #{tpu_custom_call.1} parent=1 // pred_check
      _
    $region23: #{tpu_custom_call.1} parent=1 // pred_check_branch
      %61 = sbr.rel (0) target = $region25
    $region24: #{tpu_custom_call.1} parent=1 // pred_region
      %s63 = ssub.s32 10240, 10240
      %64 = vsyncadd [#allocation9], %s63
      %s65 = sshll.u32 [#allocation10], 4
      %s66 = int_to_ptr.vmem [resolvable:$true] %s65
      %71 = dma.hbm_to_vmem [thread:$0]  %s5, 10240, %s66, [#allocation9], 128, 128, 8
    $region25: #{tpu_custom_call.1} parent=1 // pred_fallthru
      _
    // Predicated region
    $region26: #{tpu_custom_call.1} parent=1 // pred_check
      _
    $region27: #{tpu_custom_call.1} parent=1 // pred_check_branch
      %73 = sbr.rel (0) target = $region29
    $region28: #{tpu_custom_call.1} parent=1 // pred_region
      _
    $region29: #{tpu_custom_call.1} parent=1 // pred_fallthru
      _
    // Predicated region
    $region30: #{tpu_custom_call.1} parent=1 // pred_check
      _
    $region31: #{tpu_custom_call.1} parent=1 // pred_check_branch
      %75 = sbr.rel (0) target = $region33
    $region32: #{tpu_custom_call.1} parent=1 // pred_region
      %76 = dma.done [#allocation3], 128
    $region33: #{tpu_custom_call.1} parent=1 // pred_fallthru
      _
    // Predicated region
    $region34: #{tpu_custom_call.1} parent=1 // pred_check
      _
    $region35: #{tpu_custom_call.1} parent=1 // pred_check_branch
      %78 = sbr.rel (0) target = $region37
    $region36: #{tpu_custom_call.1} parent=1 // pred_region
      %79 = dma.done [#allocation6], 5120
    $region37: #{tpu_custom_call.1} parent=1 // pred_fallthru
      _
    // Predicated region
    $region38: #{tpu_custom_call.1} parent=1 // pred_check
      _
    $region39: #{tpu_custom_call.1} parent=1 // pred_check_branch
      %81 = sbr.rel (0) target = $region41
    $region40: #{tpu_custom_call.1} parent=1 // pred_region
      %82 = dma.done [#allocation6], 80
    $region41: #{tpu_custom_call.1} parent=1 // pred_fallthru
      _
    // Predicated region
    $region42: #{tpu_custom_call.1} parent=1 // pred_check
      _
    $region43: #{tpu_custom_call.1} parent=1 // pred_check_branch
      %84 = sbr.rel (0) target = $region45
    $region44: #{tpu_custom_call.1} parent=1 // pred_region
      %85 = dma.done [#allocation9], 80
    $region45: #{tpu_custom_call.1} parent=1 // pred_fallthru
      _
    // Predicated region
    $region46: #{tpu_custom_call.1} parent=1 // pred_check
      _
    $region47: #{tpu_custom_call.1} parent=1 // pred_check_branch
      %87 = sbr.rel (0) target = $region49
    $region48: #{tpu_custom_call.1} parent=1 // pred_region
      %88 = dma.done [#allocation9], 10240
    $region49: #{tpu_custom_call.1} parent=1 // pred_fallthru
      _
    %v89 = vld [vmem:[#allocation2] sm:$0xff]
    %v90 = vld [vmem:[#allocation5] sm:$0xff]
    %v91 = vld [vmem:[#allocation5 + $0x8] sm:$0xff]
    %v92 = vld [vmem:[#allocation5 + $0x10] sm:$0xff]
    %v93 = vld [vmem:[#allocation5 + $0x18] sm:$0xff]
    %v94 = vld [vmem:[#allocation5 + $0x20] sm:$0xff]
    %v95 = vld [vmem:[#allocation5 + $0x28] sm:$0xff]
    %v96 = vld [vmem:[#allocation5 + $0x30] sm:$0xff]
    %v97 = vld [vmem:[#allocation5 + $0x38] sm:$0xff]
    %v98 = vld [vmem:[#allocation5 + $0x40] sm:$0xff]
    %v99 = vld [vmem:[#allocation5 + $0x48] sm:$0xff]
    %v100 = vld [vmem:[#allocation5 + $0x50] sm:$0xff]
    %v101 = vld [vmem:[#allocation5 + $0x58] sm:$0xff]
    %v102 = vld [vmem:[#allocation5 + $0x60] sm:$0xff]
    %v103 = vld [vmem:[#allocation5 + $0x68] sm:$0xff]
    %v104 = vld [vmem:[#allocation5 + $0x70] sm:$0xff]
    %v105 = vld [vmem:[#allocation5 + $0x78] sm:$0xff]
    %v106 = vld [vmem:[#allocation5 + $0x80] sm:$0xff]
    %v107 = vld [vmem:[#allocation5 + $0x88] sm:$0xff]
    %v108 = vld [vmem:[#allocation5 + $0x90] sm:$0xff]
    %v109 = vld [vmem:[#allocation5 + $0x98] sm:$0xff]
    %v110 = vld [vmem:[#allocation5 + $0xa0] sm:$0xff]
    %v111 = vld [vmem:[#allocation5 + $0xa8] sm:$0xff]
    %v112 = vld [vmem:[#allocation5 + $0xb0] sm:$0xff]
    %v113 = vld [vmem:[#allocation5 + $0xb8] sm:$0xff]
    %v114 = vld [vmem:[#allocation5 + $0xc0] sm:$0xff]
    %v115 = vld [vmem:[#allocation5 + $0xc8] sm:$0xff]
    %v116 = vld [vmem:[#allocation5 + $0xd0] sm:$0xff]
    %v117 = vld [vmem:[#allocation5 + $0xd8] sm:$0xff]
    %v118 = vld [vmem:[#allocation5 + $0xe0] sm:$0xff]
    %v119 = vld [vmem:[#allocation5 + $0xe8] sm:$0xff]
    %v120 = vld [vmem:[#allocation5 + $0xf0] sm:$0xff]
    %v121 = vld [vmem:[#allocation5 + $0xf8] sm:$0xff]
    %v122 = vld [vmem:[#allocation5 + $0x100] sm:$0xff]
    %v123 = vld [vmem:[#allocation5 + $0x108] sm:$0xff]
    %v124 = vld [vmem:[#allocation5 + $0x110] sm:$0xff]
    %v125 = vld [vmem:[#allocation5 + $0x118] sm:$0xff]
    %v126 = vld [vmem:[#allocation5 + $0x120] sm:$0xff]
    %v127 = vld [vmem:[#allocation5 + $0x128] sm:$0xff]
    %v128 = vld [vmem:[#allocation5 + $0x130] sm:$0xff]
    %v129 = vld [vmem:[#allocation5 + $0x138] sm:$0xff]
    %v130 = vld [vmem:[#allocation7] sm:$0x1f]
    %v132 = vlaneseq
    %v133 = vshrl.u32 %v132, 7
    %v134 = vsub.s32 0, %v133
    %v135 = vrot.slane %v130, %v134
    %v136 = vlaneseq
    %v137 = vshrl.u32 %v136, 7
    %v138 = vsub.s32 1, %v137
    %v139 = vrot.slane %v130, %v138
    %v140 = vlaneseq
    %v141 = vshrl.u32 %v140, 7
    %v142 = vsub.s32 2, %v141
    %v143 = vrot.slane %v130, %v142
    %v144 = vlaneseq
    %v145 = vshrl.u32 %v144, 7
    %v146 = vsub.s32 3, %v145
    %v147 = vrot.slane %v130, %v146
    %v148 = vlaneseq
    %v149 = vshrl.u32 %v148, 7
    %v150 = vsub.s32 4, %v149
    %v151 = vrot.slane %v130, %v150
    %vm157 = vcmask 523264
    %v159 = vsel %vm157, %v89, 0
    %161 = vmatprep.subr.mxu0 0.0
    %162 = vmatpush1.msra.mxu0 0.0
    %163 = vmatprep.subr.mxu0 0.0
    %164 = vmatpush1.msra.mxu0 0.0
    %165 = vmatprep.subr.mxu0 0.0
    %166 = vmatpush1.msra.mxu0 0.0
    %167 = vmatprep.subr.mxu0 0.0
    %168 = vmatpush1.msra.mxu0 0.0
    %169 = vmatprep.subr.mxu0 0.0
    %170 = vmatpush1.msra.mxu0 0.0
    %171 = vmatprep.subr.mxu0 0.0
    %172 = vmatpush1.msra.mxu0 0.0
    %173 = vmatprep.subr.mxu0 0.0
    %174 = vmatpush1.msra.mxu0 0.0
    %175 = vmatprep.subr.mxu0 0.0
    %176 = vmatpush1.msra.mxu0 0.0
    %177 = vmatprep.subr.mxu0 %v126
    %178 = vmatpush1.msra.mxu0 %v125
    %179 = vmatprep.subr.mxu0 %v121
    %180 = vmatpush1.msra.mxu0 %v120
    %181 = vmatprep.subr.mxu0 %v116
    %182 = vmatpush1.msra.mxu0 %v115
    %183 = vmatprep.subr.mxu0 %v111
    %184 = vmatpush1.msra.mxu0 %v110
    %185 = vmatprep.subr.mxu0 %v106
    %186 = vmatpush1.msra.mxu0 %v105
    %187 = vmatprep.subr.mxu0 %v101
    %188 = vmatpush1.msra.mxu0 %v100
    %189 = vmatprep.subr.mxu0 %v96
    %190 = vmatpush1.msra.mxu0 %v95
    %191 = vmatprep.subr.mxu0 %v91
    %192 = vmatpush1.msra.mxu0 %v90
    %193 = vmatprep.subr.mxu0 0.0
    %194 = vmatpush2.msra.mxu0 0.0
    %195 = vmatprep.subr.mxu0 0.0
    %196 = vmatpush2.msra.mxu0 0.0
    %197 = vmatprep.subr.mxu0 0.0
    %198 = vmatpush2.msra.mxu0 0.0
    %199 = vmatprep.subr.mxu0 0.0
    %200 = vmatpush2.msra.mxu0 0.0
    %201 = vmatprep.subr.mxu0 0.0
    %202 = vmatpush2.msra.mxu0 0.0
    %203 = vmatprep.subr.mxu0 0.0
    %204 = vmatpush2.msra.mxu0 0.0
    %205 = vmatprep.subr.mxu0 0.0
    %206 = vmatpush2.msra.mxu0 0.0
    %207 = vmatprep.subr.mxu0 0.0
    %208 = vmatpush2.msra.mxu0 0.0
    %209 = vmatprep.subr.mxu0 0.0
    %210 = vmatpush2.msra.mxu0 0.0
    %211 = vmatprep.subr.mxu0 0.0
    %212 = vmatpush2.msra.mxu0 0.0
    %213 = vmatprep.subr.mxu0 0.0
    %214 = vmatpush2.msra.mxu0 0.0
    %215 = vmatprep.subr.mxu0 0.0
    %216 = vmatpush2.msra.mxu0 0.0
    %217 = vmatprep.subr.mxu0 0.0
    %218 = vmatpush2.msra.mxu0 0.0
    %219 = vmatprep.subr.mxu0 0.0
    %220 = vmatpush2.msra.mxu0 0.0
    %221 = vmatprep.subr.mxu0 0.0
    %222 = vmatpush2.msra.mxu0 0.0
    %223 = vmatprep.subr.mxu0 0.0
    %224 = vmatpush2.msra.mxu0 0.0
    %225 = vmatprep.mubr.f32.mxu0 0.0
    %226 = vmatmul.mubr.f32.gmra.mxu0 %v159
    %v227 = vpop.f32.mrf.mxu0
    %v228 = vadd.f32 %v135, %v227
    %v229 = vpop.f32.mrf.mxu0
    %v230 = vadd.f32 %v139, %v229
    %231 = vdwg.mxu0
    %232 = vmatprep.subr.mxu0 0.0
    %233 = vmatpush1.msra.mxu0 0.0
    %234 = vmatprep.subr.mxu0 0.0
    %235 = vmatpush1.msra.mxu0 0.0
    %236 = vmatprep.subr.mxu0 0.0
    %237 = vmatpush1.msra.mxu0 0.0
    %238 = vmatprep.subr.mxu0 0.0
    %239 = vmatpush1.msra.mxu0 0.0
    %240 = vmatprep.subr.mxu0 0.0
    %241 = vmatpush1.msra.mxu0 0.0
    %242 = vmatprep.subr.mxu0 0.0
    %243 = vmatpush1.msra.mxu0 0.0
    %244 = vmatprep.subr.mxu0 0.0
    %245 = vmatpush1.msra.mxu0 0.0
    %246 = vmatprep.subr.mxu0 0.0
    %247 = vmatpush1.msra.mxu0 0.0
    %248 = vmatprep.subr.mxu0 %v128
    %249 = vmatpush1.msra.mxu0 %v127
    %250 = vmatprep.subr.mxu0 %v123
    %251 = vmatpush1.msra.mxu0 %v122
    %252 = vmatprep.subr.mxu0 %v118
    %253 = vmatpush1.msra.mxu0 %v117
    %254 = vmatprep.subr.mxu0 %v113
    %255 = vmatpush1.msra.mxu0 %v112
    %256 = vmatprep.subr.mxu0 %v108
    %257 = vmatpush1.msra.mxu0 %v107
    %258 = vmatprep.subr.mxu0 %v103
    %259 = vmatpush1.msra.mxu0 %v102
    %260 = vmatprep.subr.mxu0 %v98
    %261 = vmatpush1.msra.mxu0 %v97
    %262 = vmatprep.subr.mxu0 %v93
    %263 = vmatpush1.msra.mxu0 %v92
    %264 = vmatprep.subr.mxu0 0.0
    %265 = vmatpush2.msra.mxu0 0.0
    %266 = vmatprep.subr.mxu0 0.0
    %267 = vmatpush2.msra.mxu0 0.0
    %268 = vmatprep.subr.mxu0 0.0
    %269 = vmatpush2.msra.mxu0 0.0
    %270 = vmatprep.subr.mxu0 0.0
    %271 = vmatpush2.msra.mxu0 0.0
    %272 = vmatprep.subr.mxu0 0.0
    %273 = vmatpush2.msra.mxu0 0.0
    %274 = vmatprep.subr.mxu0 0.0
    %275 = vmatpush2.msra.mxu0 0.0
    %276 = vmatprep.subr.mxu0 0.0
    %277 = vmatpush2.msra.mxu0 0.0
    %278 = vmatprep.subr.mxu0 0.0
    %279 = vmatpush2.msra.mxu0 0.0
    %280 = vmatprep.subr.mxu0 0.0
    %281 = vmatpush2.msra.mxu0 0.0
    %282 = vmatprep.subr.mxu0 0.0
    %283 = vmatpush2.msra.mxu0 0.0
    %284 = vmatprep.subr.mxu0 0.0
    %285 = vmatpush2.msra.mxu0 0.0
    %286 = vmatprep.subr.mxu0 0.0
    %287 = vmatpush2.msra.mxu0 0.0
    %288 = vmatprep.subr.mxu0 0.0
    %289 = vmatpush2.msra.mxu0 0.0
    %290 = vmatprep.subr.mxu0 0.0
    %291 = vmatpush2.msra.mxu0 0.0
    %292 = vmatprep.subr.mxu0 0.0
    %293 = vmatpush2.msra.mxu0 0.0
    %294 = vmatprep.subr.mxu0 0.0
    %295 = vmatpush2.msra.mxu0 0.0
    %296 = vmatprep.mubr.f32.mxu0 0.0
    %297 = vmatmul.mubr.f32.gmra.mxu0 %v159
    %v298 = vpop.f32.mrf.mxu0
    %v299 = vadd.f32 %v143, %v298
    %v300 = vpop.f32.mrf.mxu0
    %v301 = vadd.f32 %v147, %v300
    %302 = vdwg.mxu0
    %303 = vmatprep.subr.mxu0 0.0
    %304 = vmatpush1.msra.mxu0 0.0
    %305 = vmatprep.subr.mxu0 0.0
    %306 = vmatpush1.msra.mxu0 0.0
    %307 = vmatprep.subr.mxu0 0.0
    %308 = vmatpush1.msra.mxu0 0.0
    %309 = vmatprep.subr.mxu0 0.0
    %310 = vmatpush1.msra.mxu0 0.0
    %311 = vmatprep.subr.mxu0 0.0
    %312 = vmatpush1.msra.mxu0 0.0
    %313 = vmatprep.subr.mxu0 0.0
    %314 = vmatpush1.msra.mxu0 0.0
    %315 = vmatprep.subr.mxu0 0.0
    %316 = vmatpush1.msra.mxu0 0.0
    %317 = vmatprep.subr.mxu0 0.0
    %318 = vmatpush1.msra.mxu0 0.0
    %319 = vmatprep.subr.mxu0 0.0
    %320 = vmatpush1.msra.mxu0 %v129
    %321 = vmatprep.subr.mxu0 0.0
    %322 = vmatpush1.msra.mxu0 %v124
    %323 = vmatprep.subr.mxu0 0.0
    %324 = vmatpush1.msra.mxu0 %v119
    %325 = vmatprep.subr.mxu0 0.0
    %326 = vmatpush1.msra.mxu0 %v114
    %327 = vmatprep.subr.mxu0 0.0
    %328 = vmatpush1.msra.mxu0 %v109
    %329 = vmatprep.subr.mxu0 0.0
    %330 = vmatpush1.msra.mxu0 %v104
    %331 = vmatprep.subr.mxu0 0.0
    %332 = vmatpush1.msra.mxu0 %v99
    %333 = vmatprep.subr.mxu0 0.0
    %334 = vmatpush1.msra.mxu0 %v94
    %335 = vmatprep.subr.mxu0 0.0
    %336 = vmatpush2.msra.mxu0 0.0
    %337 = vmatprep.subr.mxu0 0.0
    %338 = vmatpush2.msra.mxu0 0.0
    %339 = vmatprep.subr.mxu0 0.0
    %340 = vmatpush2.msra.mxu0 0.0
    %341 = vmatprep.subr.mxu0 0.0
    %342 = vmatpush2.msra.mxu0 0.0
    %343 = vmatprep.subr.mxu0 0.0
    %344 = vmatpush2.msra.mxu0 0.0
    %345 = vmatprep.subr.mxu0 0.0
    %346 = vmatpush2.msra.mxu0 0.0
    %347 = vmatprep.subr.mxu0 0.0
    %348 = vmatpush2.msra.mxu0 0.0
    %349 = vmatprep.subr.mxu0 0.0
    %350 = vmatpush2.msra.mxu0 0.0
    %351 = vmatprep.subr.mxu0 0.0
    %352 = vmatpush2.msra.mxu0 0.0
    %353 = vmatprep.subr.mxu0 0.0
    %354 = vmatpush2.msra.mxu0 0.0
    %355 = vmatprep.subr.mxu0 0.0
    %356 = vmatpush2.msra.mxu0 0.0
    %357 = vmatprep.subr.mxu0 0.0
    %358 = vmatpush2.msra.mxu0 0.0
    %359 = vmatprep.subr.mxu0 0.0
    %360 = vmatpush2.msra.mxu0 0.0
    %361 = vmatprep.subr.mxu0 0.0
    %362 = vmatpush2.msra.mxu0 0.0
    %363 = vmatprep.subr.mxu0 0.0
    %364 = vmatpush2.msra.mxu0 0.0
    %365 = vmatprep.subr.mxu0 0.0
    %366 = vmatpush2.msra.mxu0 0.0
    %367 = vmatprep.mubr.f32.mxu0 0.0
    %368 = vmatmul.mubr.f32.gmra.mxu0 %v159
    %v369 = vpop.f32.mrf.mxu0
    %v370 = vadd.f32 %v151, %v369
    %v371 = vpop.f32.mrf.mxu0
    %372 = vdwg.mxu0
    %v373 = vmax.f32 %v228, 0.0
    %v374 = vmax.f32 %v230, 0.0
    %v375 = vmax.f32 %v299, 0.0
    %v376 = vmax.f32 %v301, 0.0
    %v377 = vmax.f32 %v370, 0.0
    %v378 = vrot.slane %v373, 4
    %v379 = vadd.f32 %v373, %v378
    %v380 = vrot.slane %v379, 2
    %v381 = vadd.f32 %v379, %v380
    %v382 = vrot.slane %v381, 1
    %v383 = vadd.f32 %v381, %v382
    %v384 = vrot.slane %v374, 4
    %v385 = vadd.f32 %v374, %v384
    %v386 = vrot.slane %v385, 2
    %v387 = vadd.f32 %v385, %v386
    %v388 = vrot.slane %v387, 1
    %v389 = vadd.f32 %v387, %v388
    %v390 = vrot.slane %v375, 4
    %v391 = vadd.f32 %v375, %v390
    %v392 = vrot.slane %v391, 2
    %v393 = vadd.f32 %v391, %v392
    %v394 = vrot.slane %v393, 1
    %v395 = vadd.f32 %v393, %v394
    %v396 = vrot.slane %v376, 4
    %v397 = vadd.f32 %v376, %v396
    %v398 = vrot.slane %v397, 2
    %v399 = vadd.f32 %v397, %v398
    %v400 = vrot.slane %v399, 1
    %v401 = vadd.f32 %v399, %v400
    %v402 = vrot.slane %v377, 4
    %v403 = vadd.f32 %v377, %v402
    %v404 = vrot.slane %v403, 2
    %v405 = vadd.f32 %v403, %v404
    %v406 = vrot.slane %v405, 1
    %v407 = vadd.f32 %v405, %v406
    %v408 = vmul.f32 %v383, 0.125
    %v409 = vmul.f32 %v389, 0.125
    %v410 = vmul.f32 %v395, 0.125
    %v411 = vmul.f32 %v401, 0.125
    %v412 = vmul.f32 %v407, 0.125
    %v413 = vmul.f32 %v373, %v373
    %v414 = vmul.f32 %v374, %v374
    %v415 = vmul.f32 %v375, %v375
    %v416 = vmul.f32 %v376, %v376
    %v417 = vmul.f32 %v377, %v377
    %v418 = vrot.slane %v413, 4
    %v419 = vadd.f32 %v413, %v418
    %v420 = vrot.slane %v419, 2
    %v421 = vadd.f32 %v419, %v420
    %v422 = vrot.slane %v421, 1
    %v423 = vadd.f32 %v421, %v422
    %v424 = vrot.slane %v414, 4
    %v425 = vadd.f32 %v414, %v424
    %v426 = vrot.slane %v425, 2
    %v427 = vadd.f32 %v425, %v426
    %v428 = vrot.slane %v427, 1
    %v429 = vadd.f32 %v427, %v428
    %v430 = vrot.slane %v415, 4
    %v431 = vadd.f32 %v415, %v430
    %v432 = vrot.slane %v431, 2
    %v433 = vadd.f32 %v431, %v432
    %v434 = vrot.slane %v433, 1
    %v435 = vadd.f32 %v433, %v434
    %v436 = vrot.slane %v416, 4
    %v437 = vadd.f32 %v416, %v436
    %v438 = vrot.slane %v437, 2
    %v439 = vadd.f32 %v437, %v438
    %v440 = vrot.slane %v439, 1
    %v441 = vadd.f32 %v439, %v440
    %v442 = vrot.slane %v417, 4
    %v443 = vadd.f32 %v417, %v442
    %v444 = vrot.slane %v443, 2
    %v445 = vadd.f32 %v443, %v444
    %v446 = vrot.slane %v445, 1
    %v447 = vadd.f32 %v445, %v446
    %v448 = vmul.f32 %v423, 0.125
    %v449 = vmul.f32 %v429, 0.125
    %v450 = vmul.f32 %v435, 0.125
    %v451 = vmul.f32 %v441, 0.125
    %v452 = vmul.f32 %v447, 0.125
    %v453 = vmul.f32 %v408, %v408
    %v454 = vmul.f32 %v409, %v409
    %v455 = vmul.f32 %v410, %v410
    %v456 = vmul.f32 %v411, %v411
    %v457 = vmul.f32 %v412, %v412
    %v458 = vsub.f32 %v448, %v453
    %v459 = vsub.f32 %v449, %v454
    %v460 = vsub.f32 %v450, %v455
    %v461 = vsub.f32 %v451, %v456
    %v462 = vsub.f32 %v452, %v457
    %v463 = vmax.f32 %v458, 0.0
    %v464 = vmax.f32 %v459, 0.0
    %v465 = vmax.f32 %v460, 0.0
    %v466 = vmax.f32 %v461, 0.0
    %v467 = vmax.f32 %v462, 0.0
    %v468 = vld [vmem:[%s3] sm:$0x1f]
    %v469 = vadd.f32 %v463, 1e-05
    %v470 = vadd.f32 %v464, 1e-05
    %v471 = vadd.f32 %v465, 1e-05
    %v472 = vadd.f32 %v466, 1e-05
    %v473 = vadd.f32 %v467, 1e-05
    %v474 = vrsqrt.pop %v469
    %v475 = vrsqrt.pop %v470
    %v476 = vrsqrt.pop %v471
    %v477 = vrsqrt.pop %v472
    %v478 = vrsqrt.pop %v473
    %v484 = vcombine.low %v474, %v475
    %v485 = vcombine.low %v476, %v477
    %v487 = vunpack.c.l.s4 1966171168
    %v488 = vunpack.c.0.s8 %v487
    %v489 = vlaneseq
    %v490 = vshrl.u32 %v489, 7
    %v491 = vsub.s32 %v488, %v490
    %v492 = vrot.slane %v484, %v491
    %v494 = vunpack.c.l.s4 1966171168
    %v495 = vunpack.c.0.s8 %v494
    %v496 = vlaneseq
    %v497 = vshrl.u32 %v496, 7
    %v498 = vsub.s32 %v495, %v497
    %v499 = vrot.slane %v485, %v498
    %v501 = vunpack.c.l.s4 1966171168
    %v502 = vunpack.c.0.s8 %v501
    %v503 = vlaneseq
    %v504 = vshrl.u32 %v503, 7
    %v505 = vsub.s32 %v502, %v504
    %v506 = vrot.slane %v478, %v505
    %v507 = vcombine.low %v492, %v499
    %v509 = vunpack.c.l.s4 1966171168
    %v510 = vunpack.c.0.s8 %v509
    %v511 = vlaneseq
    %v512 = vshrl.u32 %v511, 7
    %v513 = vsub.s32 %v510, %v512
    %v514 = vrot.slane %v507, %v513
    %v516 = vunpack.c.l.s4 1966171168
    %v517 = vunpack.c.0.s8 %v516
    %v518 = vlaneseq
    %v519 = vshrl.u32 %v518, 7
    %v520 = vsub.s32 %v517, %v519
    %v521 = vrot.slane %v506, %v520
    %v522 = vcombine.low %v514, %v521
    %v524 = vmul.f32 %v468, %v522
    %v525 = vld [vmem:[#allocation8] sm:$0x1f]
    %v527 = vlaneseq
    %v528 = vshrl.u32 %v527, 7
    %v529 = vsub.s32 0, %v528
    %v530 = vrot.slane %v524, %v529
    %v531 = vlaneseq
    %v532 = vshrl.u32 %v531, 7
    %v533 = vsub.s32 1, %v532
    %v534 = vrot.slane %v524, %v533
    %v535 = vlaneseq
    %v536 = vshrl.u32 %v535, 7
    %v537 = vsub.s32 2, %v536
    %v538 = vrot.slane %v524, %v537
    %v539 = vlaneseq
    %v540 = vshrl.u32 %v539, 7
    %v541 = vsub.s32 3, %v540
    %v542 = vrot.slane %v524, %v541
    %v543 = vlaneseq
    %v544 = vshrl.u32 %v543, 7
    %v545 = vsub.s32 4, %v544
    %v546 = vrot.slane %v524, %v545
    %v552 = vmul.f32 %v408, %v530
    %v553 = vmul.f32 %v409, %v534
    %v554 = vmul.f32 %v410, %v538
    %v555 = vmul.f32 %v411, %v542
    %v556 = vmul.f32 %v412, %v546
    %v562 = vcombine.low %v552, %v553
    %v563 = vcombine.low %v554, %v555
    %v565 = vunpack.c.l.s4 1966171168
    %v566 = vunpack.c.0.s8 %v565
    %v567 = vlaneseq
    %v568 = vshrl.u32 %v567, 7
    %v569 = vsub.s32 %v566, %v568
    %v570 = vrot.slane %v562, %v569
    %v572 = vunpack.c.l.s4 1966171168
    %v573 = vunpack.c.0.s8 %v572
    %v574 = vlaneseq
    %v575 = vshrl.u32 %v574, 7
    %v576 = vsub.s32 %v573, %v575
    %v577 = vrot.slane %v563, %v576
    %v579 = vunpack.c.l.s4 1966171168
    %v580 = vunpack.c.0.s8 %v579
    %v581 = vlaneseq
    %v582 = vshrl.u32 %v581, 7
    %v583 = vsub.s32 %v580, %v582
    %v584 = vrot.slane %v556, %v583
    %v585 = vcombine.low %v570, %v577
    %v587 = vunpack.c.l.s4 1966171168
    %v588 = vunpack.c.0.s8 %v587
    %v589 = vlaneseq
    %v590 = vshrl.u32 %v589, 7
    %v591 = vsub.s32 %v588, %v590
    %v592 = vrot.slane %v585, %v591
    %v594 = vunpack.c.l.s4 1966171168
    %v595 = vunpack.c.0.s8 %v594
    %v596 = vlaneseq
    %v597 = vshrl.u32 %v596, 7
    %v598 = vsub.s32 %v595, %v597
    %v599 = vrot.slane %v584, %v598
    %v600 = vcombine.low %v592, %v599
    %v602 = vsub.f32 %v525, %v600
    %v603 = vld [vmem:[%s6] sm:$0x1]
    %v604 = vld [vmem:[#allocation10] sm:$0xff]
    %v605 = vld [vmem:[#allocation10 + $0x8] sm:$0xff]
    %v606 = vld [vmem:[#allocation10 + $0x10] sm:$0xff]
    %v607 = vld [vmem:[#allocation10 + $0x18] sm:$0xff]
    %v608 = vld [vmem:[#allocation10 + $0x20] sm:$0xff]
    %v609 = vld [vmem:[#allocation10 + $0x28] sm:$0xff]
    %v610 = vld [vmem:[#allocation10 + $0x30] sm:$0xff]
    %v611 = vld [vmem:[#allocation10 + $0x38] sm:$0xff]
    %v612 = vld [vmem:[#allocation10 + $0x40] sm:$0xff]
    %v613 = vld [vmem:[#allocation10 + $0x48] sm:$0xff]
    %v614 = vld [vmem:[#allocation10 + $0x50] sm:$0xff]
    %v615 = vld [vmem:[#allocation10 + $0x58] sm:$0xff]
    %v616 = vld [vmem:[#allocation10 + $0x60] sm:$0xff]
    %v617 = vld [vmem:[#allocation10 + $0x68] sm:$0xff]
    %v618 = vld [vmem:[#allocation10 + $0x70] sm:$0xff]
    %v619 = vld [vmem:[#allocation10 + $0x78] sm:$0xff]
    %v620 = vld [vmem:[#allocation10 + $0x80] sm:$0xff]
    %v621 = vld [vmem:[#allocation10 + $0x88] sm:$0xff]
    %v622 = vld [vmem:[#allocation10 + $0x90] sm:$0xff]
    %v623 = vld [vmem:[#allocation10 + $0x98] sm:$0xff]
    %v624 = vld [vmem:[#allocation10 + $0xa0] sm:$0xff]
    %v625 = vld [vmem:[#allocation10 + $0xa8] sm:$0xff]
    %v626 = vld [vmem:[#allocation10 + $0xb0] sm:$0xff]
    %v627 = vld [vmem:[#allocation10 + $0xb8] sm:$0xff]
    %v628 = vld [vmem:[#allocation10 + $0xc0] sm:$0xff]
    %v629 = vld [vmem:[#allocation10 + $0xc8] sm:$0xff]
    %v630 = vld [vmem:[#allocation10 + $0xd0] sm:$0xff]
    %v631 = vld [vmem:[#allocation10 + $0xd8] sm:$0xff]
    %v632 = vld [vmem:[#allocation10 + $0xe0] sm:$0xff]
    %v633 = vld [vmem:[#allocation10 + $0xe8] sm:$0xff]
    %v634 = vld [vmem:[#allocation10 + $0xf0] sm:$0xff]
    %v635 = vld [vmem:[#allocation10 + $0xf8] sm:$0xff]
    %v636 = vld [vmem:[#allocation10 + $0x100] sm:$0xff]
    %v637 = vld [vmem:[#allocation10 + $0x108] sm:$0xff]
    %v638 = vld [vmem:[#allocation10 + $0x110] sm:$0xff]
    %v639 = vld [vmem:[#allocation10 + $0x118] sm:$0xff]
    %v640 = vld [vmem:[#allocation10 + $0x120] sm:$0xff]
    %v641 = vld [vmem:[#allocation10 + $0x128] sm:$0xff]
    %v642 = vld [vmem:[#allocation10 + $0x130] sm:$0xff]
    %v643 = vld [vmem:[#allocation10 + $0x138] sm:$0xff]
    %v644 = vld [vmem:[#allocation10 + $0x140] sm:$0xff]
    %v645 = vld [vmem:[#allocation10 + $0x148] sm:$0xff]
    %v646 = vld [vmem:[#allocation10 + $0x150] sm:$0xff]
    %v647 = vld [vmem:[#allocation10 + $0x158] sm:$0xff]
    %v648 = vld [vmem:[#allocation10 + $0x160] sm:$0xff]
    %v649 = vld [vmem:[#allocation10 + $0x168] sm:$0xff]
    %v650 = vld [vmem:[#allocation10 + $0x170] sm:$0xff]
    %v651 = vld [vmem:[#allocation10 + $0x178] sm:$0xff]
    %v652 = vld [vmem:[#allocation10 + $0x180] sm:$0xff]
    %v653 = vld [vmem:[#allocation10 + $0x188] sm:$0xff]
    %v654 = vld [vmem:[#allocation10 + $0x190] sm:$0xff]
    %v655 = vld [vmem:[#allocation10 + $0x198] sm:$0xff]
    %v656 = vld [vmem:[#allocation10 + $0x1a0] sm:$0xff]
    %v657 = vld [vmem:[#allocation10 + $0x1a8] sm:$0xff]
    %v658 = vld [vmem:[#allocation10 + $0x1b0] sm:$0xff]
    %v659 = vld [vmem:[#allocation10 + $0x1b8] sm:$0xff]
    %v660 = vld [vmem:[#allocation10 + $0x1c0] sm:$0xff]
    %v661 = vld [vmem:[#allocation10 + $0x1c8] sm:$0xff]
    %v662 = vld [vmem:[#allocation10 + $0x1d0] sm:$0xff]
    %v663 = vld [vmem:[#allocation10 + $0x1d8] sm:$0xff]
    %v664 = vld [vmem:[#allocation10 + $0x1e0] sm:$0xff]
    %v665 = vld [vmem:[#allocation10 + $0x1e8] sm:$0xff]
    %v666 = vld [vmem:[#allocation10 + $0x1f0] sm:$0xff]
    %v667 = vld [vmem:[#allocation10 + $0x1f8] sm:$0xff]
    %v668 = vld [vmem:[#allocation10 + $0x200] sm:$0xff]
    %v669 = vld [vmem:[#allocation10 + $0x208] sm:$0xff]
    %v670 = vld [vmem:[#allocation10 + $0x210] sm:$0xff]
    %v671 = vld [vmem:[#allocation10 + $0x218] sm:$0xff]
    %v672 = vld [vmem:[#allocation10 + $0x220] sm:$0xff]
    %v673 = vld [vmem:[#allocation10 + $0x228] sm:$0xff]
    %v674 = vld [vmem:[#allocation10 + $0x230] sm:$0xff]
    %v675 = vld [vmem:[#allocation10 + $0x238] sm:$0xff]
    %v676 = vld [vmem:[#allocation10 + $0x240] sm:$0xff]
    %v677 = vld [vmem:[#allocation10 + $0x248] sm:$0xff]
    %v678 = vld [vmem:[#allocation10 + $0x250] sm:$0xff]
    %v679 = vld [vmem:[#allocation10 + $0x258] sm:$0xff]
    %v680 = vld [vmem:[#allocation10 + $0x260] sm:$0xff]
    %v681 = vld [vmem:[#allocation10 + $0x268] sm:$0xff]
    %v682 = vld [vmem:[#allocation10 + $0x270] sm:$0xff]
    %v683 = vld [vmem:[#allocation10 + $0x278] sm:$0xff]
    %v685 = vlaneseq
    %v686 = vshrl.u32 %v685, 7
    %v687 = vsub.s32 0, %v686
    %v688 = vrot.slane %v602, %v687
    %v689 = vlaneseq
    %v690 = vshrl.u32 %v689, 7
    %v691 = vsub.s32 1, %v690
    %v692 = vrot.slane %v602, %v691
    %v693 = vlaneseq
    %v694 = vshrl.u32 %v693, 7
    %v695 = vsub.s32 2, %v694
    %v696 = vrot.slane %v602, %v695
    %v697 = vlaneseq
    %v698 = vshrl.u32 %v697, 7
    %v699 = vsub.s32 3, %v698
    %v700 = vrot.slane %v602, %v699
    %v701 = vlaneseq
    %v702 = vshrl.u32 %v701, 7
    %v703 = vsub.s32 4, %v702
    %v704 = vrot.slane %v602, %v703
    %710 = vmatprep.subr.mxu0 0.0
    %711 = vmatpush1.msra.mxu0 %v619
    %712 = vmatprep.subr.mxu0 0.0
    %713 = vmatpush1.msra.mxu0 %v618
    %714 = vmatprep.subr.mxu0 0.0
    %715 = vmatpush1.msra.mxu0 %v617
    %716 = vmatprep.subr.mxu0 0.0
    %717 = vmatpush1.msra.mxu0 %v616
    %718 = vmatprep.subr.mxu0 0.0
    %719 = vmatpush1.msra.mxu0 %v615
    %720 = vmatprep.subr.mxu0 0.0
    %721 = vmatpush1.msra.mxu0 %v614
    %722 = vmatprep.subr.mxu0 0.0
    %723 = vmatpush1.msra.mxu0 %v613
    %724 = vmatprep.subr.mxu0 0.0
    %725 = vmatpush1.msra.mxu0 %v612
    %726 = vmatprep.subr.mxu0 0.0
    %727 = vmatpush1.msra.mxu0 %v611
    %728 = vmatprep.subr.mxu0 0.0
    %729 = vmatpush1.msra.mxu0 %v610
    %730 = vmatprep.subr.mxu0 0.0
    %731 = vmatpush1.msra.mxu0 %v609
    %732 = vmatprep.subr.mxu0 0.0
    %733 = vmatpush1.msra.mxu0 %v608
    %734 = vmatprep.subr.mxu0 0.0
    %735 = vmatpush1.msra.mxu0 %v607
    %736 = vmatprep.subr.mxu0 0.0
    %737 = vmatpush1.msra.mxu0 %v606
    %738 = vmatprep.subr.mxu0 0.0
    %739 = vmatpush1.msra.mxu0 %v605
    %740 = vmatprep.subr.mxu0 0.0
    %741 = vmatpush1.msra.mxu0 %v604
    %742 = vmatprep.subr.mxu0 0.0
    %743 = vmatpush2.msra.mxu0 %v635
    %744 = vmatprep.subr.mxu0 0.0
    %745 = vmatpush2.msra.mxu0 %v634
    %746 = vmatprep.subr.mxu0 0.0
    %747 = vmatpush2.msra.mxu0 %v633
    %748 = vmatprep.subr.mxu0 0.0
    %749 = vmatpush2.msra.mxu0 %v632
    %750 = vmatprep.subr.mxu0 0.0
    %751 = vmatpush2.msra.mxu0 %v631
    %752 = vmatprep.subr.mxu0 0.0
    %753 = vmatpush2.msra.mxu0 %v630
    %754 = vmatprep.subr.mxu0 0.0
    %755 = vmatpush2.msra.mxu0 %v629
    %756 = vmatprep.subr.mxu0 0.0
    %757 = vmatpush2.msra.mxu0 %v628
    %758 = vmatprep.subr.mxu0 0.0
    %759 = vmatpush2.msra.mxu0 %v627
    %760 = vmatprep.subr.mxu0 0.0
    %761 = vmatpush2.msra.mxu0 %v626
    %762 = vmatprep.subr.mxu0 0.0
    %763 = vmatpush2.msra.mxu0 %v625
    %764 = vmatprep.subr.mxu0 0.0
    %765 = vmatpush2.msra.mxu0 %v624
    %766 = vmatprep.subr.mxu0 0.0
    %767 = vmatpush2.msra.mxu0 %v623
    %768 = vmatprep.subr.mxu0 0.0
    %769 = vmatpush2.msra.mxu0 %v622
    %770 = vmatprep.subr.mxu0 0.0
    %771 = vmatpush2.msra.mxu0 %v621
    %772 = vmatprep.subr.mxu0 0.0
    %773 = vmatpush2.msra.mxu0 %v620
    %774 = vmatprep.mubr.f32.mxu0 %v692
    %775 = vmatmul.mubr.f32.gmra.mxu0 %v688
    %v776 = vpop.f32.mrf.mxu0
    %v777 = vadd.f32 0.0, %v776
    %v778 = vpop.f32.mrf.mxu0
    %779 = vdwg.mxu0
    %780 = vmatprep.subr.mxu0 0.0
    %781 = vmatpush1.msra.mxu0 %v651
    %782 = vmatprep.subr.mxu0 0.0
    %783 = vmatpush1.msra.mxu0 %v650
    %784 = vmatprep.subr.mxu0 0.0
    %785 = vmatpush1.msra.mxu0 %v649
    %786 = vmatprep.subr.mxu0 0.0
    %787 = vmatpush1.msra.mxu0 %v648
    %788 = vmatprep.subr.mxu0 0.0
    %789 = vmatpush1.msra.mxu0 %v647
    %790 = vmatprep.subr.mxu0 0.0
    %791 = vmatpush1.msra.mxu0 %v646
    %792 = vmatprep.subr.mxu0 0.0
    %793 = vmatpush1.msra.mxu0 %v645
    %794 = vmatprep.subr.mxu0 0.0
    %795 = vmatpush1.msra.mxu0 %v644
    %796 = vmatprep.subr.mxu0 0.0
    %797 = vmatpush1.msra.mxu0 %v643
    %798 = vmatprep.subr.mxu0 0.0
    %799 = vmatpush1.msra.mxu0 %v642
    %800 = vmatprep.subr.mxu0 0.0
    %801 = vmatpush1.msra.mxu0 %v641
    %802 = vmatprep.subr.mxu0 0.0
    %803 = vmatpush1.msra.mxu0 %v640
    %804 = vmatprep.subr.mxu0 0.0
    %805 = vmatpush1.msra.mxu0 %v639
    %806 = vmatprep.subr.mxu0 0.0
    %807 = vmatpush1.msra.mxu0 %v638
    %808 = vmatprep.subr.mxu0 0.0
    %809 = vmatpush1.msra.mxu0 %v637
    %810 = vmatprep.subr.mxu0 0.0
    %811 = vmatpush1.msra.mxu0 %v636
    %812 = vmatprep.subr.mxu0 0.0
    %813 = vmatpush2.msra.mxu0 %v667
    %814 = vmatprep.subr.mxu0 0.0
    %815 = vmatpush2.msra.mxu0 %v666
    %816 = vmatprep.subr.mxu0 0.0
    %817 = vmatpush2.msra.mxu0 %v665
    %818 = vmatprep.subr.mxu0 0.0
    %819 = vmatpush2.msra.mxu0 %v664
    %820 = vmatprep.subr.mxu0 0.0
    %821 = vmatpush2.msra.mxu0 %v663
    %822 = vmatprep.subr.mxu0 0.0
    %823 = vmatpush2.msra.mxu0 %v662
    %824 = vmatprep.subr.mxu0 0.0
    %825 = vmatpush2.msra.mxu0 %v661
    %826 = vmatprep.subr.mxu0 0.0
    %827 = vmatpush2.msra.mxu0 %v660
    %828 = vmatprep.subr.mxu0 0.0
    %829 = vmatpush2.msra.mxu0 %v659
    %830 = vmatprep.subr.mxu0 0.0
    %831 = vmatpush2.msra.mxu0 %v658
    %832 = vmatprep.subr.mxu0 0.0
    %833 = vmatpush2.msra.mxu0 %v657
    %834 = vmatprep.subr.mxu0 0.0
    %835 = vmatpush2.msra.mxu0 %v656
    %836 = vmatprep.subr.mxu0 0.0
    %837 = vmatpush2.msra.mxu0 %v655
    %838 = vmatprep.subr.mxu0 0.0
    %839 = vmatpush2.msra.mxu0 %v654
    %840 = vmatprep.subr.mxu0 0.0
    %841 = vmatpush2.msra.mxu0 %v653
    %842 = vmatprep.subr.mxu0 0.0
    %843 = vmatpush2.msra.mxu0 %v652
    %844 = vmatprep.mubr.f32.mxu0 %v700
    %845 = vmatmul.mubr.f32.gmra.mxu0 %v696
    %v846 = vpop.f32.mrf.mxu0
    %v847 = vadd.f32 %v777, %v846
    %v848 = vpop.f32.mrf.mxu0
    %849 = vdwg.mxu0
    %850 = vmatprep.subr.mxu0 0.0
    %851 = vmatpush1.msra.mxu0 %v683
    %852 = vmatprep.subr.mxu0 0.0
    %853 = vmatpush1.msra.mxu0 %v682
    %854 = vmatprep.subr.mxu0 0.0
    %855 = vmatpush1.msra.mxu0 %v681
    %856 = vmatprep.subr.mxu0 0.0
    %857 = vmatpush1.msra.mxu0 %v680
    %858 = vmatprep.subr.mxu0 0.0
    %859 = vmatpush1.msra.mxu0 %v679
    %860 = vmatprep.subr.mxu0 0.0
    %861 = vmatpush1.msra.mxu0 %v678
    %862 = vmatprep.subr.mxu0 0.0
    %863 = vmatpush1.msra.mxu0 %v677
    %864 = vmatprep.subr.mxu0 0.0
    %865 = vmatpush1.msra.mxu0 %v676
    %866 = vmatprep.subr.mxu0 0.0
    %867 = vmatpush1.msra.mxu0 %v675
    %868 = vmatprep.subr.mxu0 0.0
    %869 = vmatpush1.msra.mxu0 %v674
    %870 = vmatprep.subr.mxu0 0.0
    %871 = vmatpush1.msra.mxu0 %v673
    %872 = vmatprep.subr.mxu0 0.0
    %873 = vmatpush1.msra.mxu0 %v672
    %874 = vmatprep.subr.mxu0 0.0
    %875 = vmatpush1.msra.mxu0 %v671
    %876 = vmatprep.subr.mxu0 0.0
    %877 = vmatpush1.msra.mxu0 %v670
    %878 = vmatprep.subr.mxu0 0.0
    %879 = vmatpush1.msra.mxu0 %v669
    %880 = vmatprep.subr.mxu0 0.0
    %881 = vmatpush1.msra.mxu0 %v668
    %882 = vmatprep.subr.mxu0 0.0
    %883 = vmatpush2.msra.mxu0 0.0
    %884 = vmatprep.subr.mxu0 0.0
    %885 = vmatpush2.msra.mxu0 0.0
    %886 = vmatprep.subr.mxu0 0.0
    %887 = vmatpush2.msra.mxu0 0.0
    %888 = vmatprep.subr.mxu0 0.0
    %889 = vmatpush2.msra.mxu0 0.0
    %890 = vmatprep.subr.mxu0 0.0
    %891 = vmatpush2.msra.mxu0 0.0
    %892 = vmatprep.subr.mxu0 0.0
    %893 = vmatpush2.msra.mxu0 0.0
    %894 = vmatprep.subr.mxu0 0.0
    %895 = vmatpush2.msra.mxu0 0.0
    %896 = vmatprep.subr.mxu0 0.0
    %897 = vmatpush2.msra.mxu0 0.0
    %898 = vmatprep.subr.mxu0 0.0
    %899 = vmatpush2.msra.mxu0 0.0
    %900 = vmatprep.subr.mxu0 0.0
    %901 = vmatpush2.msra.mxu0 0.0
    %902 = vmatprep.subr.mxu0 0.0
    %903 = vmatpush2.msra.mxu0 0.0
    %904 = vmatprep.subr.mxu0 0.0
    %905 = vmatpush2.msra.mxu0 0.0
    %906 = vmatprep.subr.mxu0 0.0
    %907 = vmatpush2.msra.mxu0 0.0
    %908 = vmatprep.subr.mxu0 0.0
    %909 = vmatpush2.msra.mxu0 0.0
    %910 = vmatprep.subr.mxu0 0.0
    %911 = vmatpush2.msra.mxu0 0.0
    %912 = vmatprep.subr.mxu0 0.0
    %913 = vmatpush2.msra.mxu0 0.0
    %914 = vmatprep.mubr.f32.mxu0 0.0
    %915 = vmatmul.mubr.f32.gmra.mxu0 %v704
    %v916 = vpop.f32.mrf.mxu0
    %v917 = vadd.f32 %v847, %v916
    %v918 = vpop.f32.mrf.mxu0
    %919 = vdwg.mxu0
    %v920 = vadd.f32 %v603, %v917
    %v921 = vmul.f32 %v373, %v530
    %v922 = vmul.f32 %v374, %v534
    %v923 = vmul.f32 %v375, %v538
    %v924 = vmul.f32 %v376, %v542
    %v925 = vmul.f32 %v377, %v546
    %v927 = vlaneseq
    %v928 = vshrl.u32 %v927, 7
    %v929 = vsub.s32 0, %v928
    %v930 = vrot.slane %v920, %v929
    %932 = vmatprep.subr.mxu0 0.0
    %933 = vmatpush1.msra.mxu0 %v619
    %934 = vmatprep.subr.mxu0 0.0
    %935 = vmatpush1.msra.mxu0 %v618
    %936 = vmatprep.subr.mxu0 0.0
    %937 = vmatpush1.msra.mxu0 %v617
    %938 = vmatprep.subr.mxu0 0.0
    %939 = vmatpush1.msra.mxu0 %v616
    %940 = vmatprep.subr.mxu0 0.0
    %941 = vmatpush1.msra.mxu0 %v615
    %942 = vmatprep.subr.mxu0 0.0
    %943 = vmatpush1.msra.mxu0 %v614
    %944 = vmatprep.subr.mxu0 0.0
    %945 = vmatpush1.msra.mxu0 %v613
    %946 = vmatprep.subr.mxu0 0.0
    %947 = vmatpush1.msra.mxu0 %v612
    %948 = vmatprep.subr.mxu0 0.0
    %949 = vmatpush1.msra.mxu0 %v611
    %950 = vmatprep.subr.mxu0 0.0
    %951 = vmatpush1.msra.mxu0 %v610
    %952 = vmatprep.subr.mxu0 0.0
    %953 = vmatpush1.msra.mxu0 %v609
    %954 = vmatprep.subr.mxu0 0.0
    %955 = vmatpush1.msra.mxu0 %v608
    %956 = vmatprep.subr.mxu0 0.0
    %957 = vmatpush1.msra.mxu0 %v607
    %958 = vmatprep.subr.mxu0 0.0
    %959 = vmatpush1.msra.mxu0 %v606
    %960 = vmatprep.subr.mxu0 0.0
    %961 = vmatpush1.msra.mxu0 %v605
    %962 = vmatprep.subr.mxu0 0.0
    %963 = vmatpush1.msra.mxu0 %v604
    %964 = vmatprep.subr.mxu0 0.0
    %965 = vmatpush2.msra.mxu0 %v635
    %966 = vmatprep.subr.mxu0 0.0
    %967 = vmatpush2.msra.mxu0 %v634
    %968 = vmatprep.subr.mxu0 0.0
    %969 = vmatpush2.msra.mxu0 %v633
    %970 = vmatprep.subr.mxu0 0.0
    %971 = vmatpush2.msra.mxu0 %v632
    %972 = vmatprep.subr.mxu0 0.0
    %973 = vmatpush2.msra.mxu0 %v631
    %974 = vmatprep.subr.mxu0 0.0
    %975 = vmatpush2.msra.mxu0 %v630
    %976 = vmatprep.subr.mxu0 0.0
    %977 = vmatpush2.msra.mxu0 %v629
    %978 = vmatprep.subr.mxu0 0.0
    %979 = vmatpush2.msra.mxu0 %v628
    %980 = vmatprep.subr.mxu0 0.0
    %981 = vmatpush2.msra.mxu0 %v627
    %982 = vmatprep.subr.mxu0 0.0
    %983 = vmatpush2.msra.mxu0 %v626
    %984 = vmatprep.subr.mxu0 0.0
    %985 = vmatpush2.msra.mxu0 %v625
    %986 = vmatprep.subr.mxu0 0.0
    %987 = vmatpush2.msra.mxu0 %v624
    %988 = vmatprep.subr.mxu0 0.0
    %989 = vmatpush2.msra.mxu0 %v623
    %990 = vmatprep.subr.mxu0 0.0
    %991 = vmatpush2.msra.mxu0 %v622
    %992 = vmatprep.subr.mxu0 0.0
    %993 = vmatpush2.msra.mxu0 %v621
    %994 = vmatprep.subr.mxu0 0.0
    %995 = vmatpush2.msra.mxu0 %v620
    %996 = vmatprep.mubr.f32.mxu0 %v922
    %997 = vmatmul.mubr.f32.gmra.mxu0 %v921
    %v998 = vpop.f32.mrf.mxu0
    %v999 = vadd.f32 %v930, %v998
    %v1000 = vpop.f32.mrf.mxu0
    %1001 = vdwg.mxu0
    %1002 = vmatprep.subr.mxu0 0.0
    %1003 = vmatpush1.msra.mxu0 %v651
    %1004 = vmatprep.subr.mxu0 0.0
    %1005 = vmatpush1.msra.mxu0 %v650
    %1006 = vmatprep.subr.mxu0 0.0
    %1007 = vmatpush1.msra.mxu0 %v649
    %1008 = vmatprep.subr.mxu0 0.0
    %1009 = vmatpush1.msra.mxu0 %v648
    %1010 = vmatprep.subr.mxu0 0.0
    %1011 = vmatpush1.msra.mxu0 %v647
    %1012 = vmatprep.subr.mxu0 0.0
    %1013 = vmatpush1.msra.mxu0 %v646
    %1014 = vmatprep.subr.mxu0 0.0
    %1015 = vmatpush1.msra.mxu0 %v645
    %1016 = vmatprep.subr.mxu0 0.0
    %1017 = vmatpush1.msra.mxu0 %v644
    %1018 = vmatprep.subr.mxu0 0.0
    %1019 = vmatpush1.msra.mxu0 %v643
    %1020 = vmatprep.subr.mxu0 0.0
    %1021 = vmatpush1.msra.mxu0 %v642
    %1022 = vmatprep.subr.mxu0 0.0
    %1023 = vmatpush1.msra.mxu0 %v641
    %1024 = vmatprep.subr.mxu0 0.0
    %1025 = vmatpush1.msra.mxu0 %v640
    %1026 = vmatprep.subr.mxu0 0.0
    %1027 = vmatpush1.msra.mxu0 %v639
    %1028 = vmatprep.subr.mxu0 0.0
    %1029 = vmatpush1.msra.mxu0 %v638
    %1030 = vmatprep.subr.mxu0 0.0
    %1031 = vmatpush1.msra.mxu0 %v637
    %1032 = vmatprep.subr.mxu0 0.0
    %1033 = vmatpush1.msra.mxu0 %v636
    %1034 = vmatprep.subr.mxu0 0.0
    %1035 = vmatpush2.msra.mxu0 %v667
    %1036 = vmatprep.subr.mxu0 0.0
    %1037 = vmatpush2.msra.mxu0 %v666
    %1038 = vmatprep.subr.mxu0 0.0
    %1039 = vmatpush2.msra.mxu0 %v665
    %1040 = vmatprep.subr.mxu0 0.0
    %1041 = vmatpush2.msra.mxu0 %v664
    %1042 = vmatprep.subr.mxu0 0.0
    %1043 = vmatpush2.msra.mxu0 %v663
    %1044 = vmatprep.subr.mxu0 0.0
    %1045 = vmatpush2.msra.mxu0 %v662
    %1046 = vmatprep.subr.mxu0 0.0
    %1047 = vmatpush2.msra.mxu0 %v661
    %1048 = vmatprep.subr.mxu0 0.0
    %1049 = vmatpush2.msra.mxu0 %v660
    %1050 = vmatprep.subr.mxu0 0.0
    %1051 = vmatpush2.msra.mxu0 %v659
    %1052 = vmatprep.subr.mxu0 0.0
    %1053 = vmatpush2.msra.mxu0 %v658
    %1054 = vmatprep.subr.mxu0 0.0
    %1055 = vmatpush2.msra.mxu0 %v657
    %1056 = vmatprep.subr.mxu0 0.0
    %1057 = vmatpush2.msra.mxu0 %v656
    %1058 = vmatprep.subr.mxu0 0.0
    %1059 = vmatpush2.msra.mxu0 %v655
    %1060 = vmatprep.subr.mxu0 0.0
    %1061 = vmatpush2.msra.mxu0 %v654
    %1062 = vmatprep.subr.mxu0 0.0
    %1063 = vmatpush2.msra.mxu0 %v653
    %1064 = vmatprep.subr.mxu0 0.0
    %1065 = vmatpush2.msra.mxu0 %v652
    %1066 = vmatprep.mubr.f32.mxu0 %v924
    %1067 = vmatmul.mubr.f32.gmra.mxu0 %v923
    %v1068 = vpop.f32.mrf.mxu0
    %v1069 = vadd.f32 %v999, %v1068
    %v1070 = vpop.f32.mrf.mxu0
    %1071 = vdwg.mxu0
    %1072 = vmatprep.subr.mxu0 0.0
    %1073 = vmatpush1.msra.mxu0 %v683
    %1074 = vmatprep.subr.mxu0 0.0
    %1075 = vmatpush1.msra.mxu0 %v682
    %1076 = vmatprep.subr.mxu0 0.0
    %1077 = vmatpush1.msra.mxu0 %v681
    %1078 = vmatprep.subr.mxu0 0.0
    %1079 = vmatpush1.msra.mxu0 %v680
    %1080 = vmatprep.subr.mxu0 0.0
    %1081 = vmatpush1.msra.mxu0 %v679
    %1082 = vmatprep.subr.mxu0 0.0
    %1083 = vmatpush1.msra.mxu0 %v678
    %1084 = vmatprep.subr.mxu0 0.0
    %1085 = vmatpush1.msra.mxu0 %v677
    %1086 = vmatprep.subr.mxu0 0.0
    %1087 = vmatpush1.msra.mxu0 %v676
    %1088 = vmatprep.subr.mxu0 0.0
    %1089 = vmatpush1.msra.mxu0 %v675
    %1090 = vmatprep.subr.mxu0 0.0
    %1091 = vmatpush1.msra.mxu0 %v674
    %1092 = vmatprep.subr.mxu0 0.0
    %1093 = vmatpush1.msra.mxu0 %v673
    %1094 = vmatprep.subr.mxu0 0.0
    %1095 = vmatpush1.msra.mxu0 %v672
    %1096 = vmatprep.subr.mxu0 0.0
    %1097 = vmatpush1.msra.mxu0 %v671
    %1098 = vmatprep.subr.mxu0 0.0
    %1099 = vmatpush1.msra.mxu0 %v670
    %1100 = vmatprep.subr.mxu0 0.0
    %1101 = vmatpush1.msra.mxu0 %v669
    %1102 = vmatprep.subr.mxu0 0.0
    %1103 = vmatpush1.msra.mxu0 %v668
    %1104 = vmatprep.subr.mxu0 0.0
    %1105 = vmatpush2.msra.mxu0 0.0
    %1106 = vmatprep.subr.mxu0 0.0
    %1107 = vmatpush2.msra.mxu0 0.0
    %1108 = vmatprep.subr.mxu0 0.0
    %1109 = vmatpush2.msra.mxu0 0.0
    %1110 = vmatprep.subr.mxu0 0.0
    %1111 = vmatpush2.msra.mxu0 0.0
    %1112 = vmatprep.subr.mxu0 0.0
    %1113 = vmatpush2.msra.mxu0 0.0
    %1114 = vmatprep.subr.mxu0 0.0
    %1115 = vmatpush2.msra.mxu0 0.0
    %1116 = vmatprep.subr.mxu0 0.0
    %1117 = vmatpush2.msra.mxu0 0.0
    %1118 = vmatprep.subr.mxu0 0.0
    %1119 = vmatpush2.msra.mxu0 0.0
    %1120 = vmatprep.subr.mxu0 0.0
    %1121 = vmatpush2.msra.mxu0 0.0
    %1122 = vmatprep.subr.mxu0 0.0
    %1123 = vmatpush2.msra.mxu0 0.0
    %1124 = vmatprep.subr.mxu0 0.0
    %1125 = vmatpush2.msra.mxu0 0.0
    %1126 = vmatprep.subr.mxu0 0.0
    %1127 = vmatpush2.msra.mxu0 0.0
    %1128 = vmatprep.subr.mxu0 0.0
    %1129 = vmatpush2.msra.mxu0 0.0
    %1130 = vmatprep.subr.mxu0 0.0
    %1131 = vmatpush2.msra.mxu0 0.0
    %1132 = vmatprep.subr.mxu0 0.0
    %1133 = vmatpush2.msra.mxu0 0.0
    %1134 = vmatprep.subr.mxu0 0.0
    %1135 = vmatpush2.msra.mxu0 0.0
    %1136 = vmatprep.mubr.f32.mxu0 0.0
    %1137 = vmatmul.mubr.f32.gmra.mxu0 %v925
    %v1138 = vpop.f32.mrf.mxu0
    %v1139 = vadd.f32 %v1069, %v1138
    %v1140 = vpop.f32.mrf.mxu0
    %1141 = vdwg.mxu0
    %1142 = vst [vmem:[#allocation11] sm:$0xff] %v1139
    // Predicated region
    $region50: #{tpu_custom_call.1} parent=1 // pred_check
      _
    $region51: #{tpu_custom_call.1} parent=1 // pred_check_branch
      %1144 = sbr.rel (0) target = $region53
    $region52: #{tpu_custom_call.1} parent=1 // pred_region
      %s1146 = ssub.s32 128, 128
      %1147 = vsyncadd [#allocation4], %s1146
      %s1149 = sshll.u32 [#allocation11], 4
      %s1150 = int_to_ptr.vmem [resolvable:$true] %s1149
      %1152 = dma.vmem_to_hbm [thread:$0]  %s1150, 128, %s7, [#allocation4]
    $region53: #{tpu_custom_call.1} parent=1 // pred_fallthru
      _
    // Predicated region
    $region54: #{tpu_custom_call.1} parent=1 // pred_check
      _
    $region55: #{tpu_custom_call.1} parent=1 // pred_check_branch
      %1154 = sbr.rel (0) target = $region57
    $region56: #{tpu_custom_call.1} parent=1 // pred_region
      %1155 = dma.done [#allocation4], 128
    $region57: #{tpu_custom_call.1} parent=1 // pred_fallthru
      _
    %1156 = vsyncpa [#allocation3], 1
    %1157 = vsyncpa [#allocation6], 1
    %1158 = vsyncpa [#allocation9], 1
    %1159 = vsyncpa [#allocation4], 1

</llo_original>
